<compile_context>
chip_gen: v7x
topology: tpu7x:2x2x1
jax: 0.10.0
libtpu: 0.0.40
codegen_flags: <defaults>
</compile_context>

<pallas_src>
import functools

import jax
import jax.numpy as jnp
from jax.experimental import pallas as pl
from jax.experimental.pallas import tpu as pltpu


def _round_up(x, m):
    return (x + m - 1) // m * m


def _device_defaults():
    """(batch tile, vmem_limit_bytes) tuned per TPU generation."""
    try:
        kind = jax.devices()[0].device_kind.lower()
    except Exception:  # pragma: no cover - defensive
        kind = ""
    if "v5" in kind or "v6" in kind:
        # 128 MiB physical VMEM: large streamed tiles, generous scoped limit.
        return 512, 96 * 1024 * 1024
    # v7x has 64 MiB VMEM per TensorCore; also the safe fallback for unknown chips.
    return 256, 48 * 1024 * 1024


def _pick_tm(batch, tm_max):
    """Pick the batch tile: as large as allowed, but keep >=2 grid steps when possible."""
    bp = _round_up(max(batch, 1), 128)
    tm = min(tm_max, bp)
    if bp > 128 and bp // tm < 2:
        tm = _round_up(pl.cdiv(bp, 2), 128)
    return tm


# ----------------------------- Pallas kernel ---------------------------------
def improved_mlp_kernel(x_ref, w1_ref, b1_ref, w2_ref, b2_ref, out_ref):
    """One (tm, :) batch tile of the fused forward pass.

    x_ref  : (tm, Din_p) bf16  flattened embeddings (batch tile, zero-padded cols)
    w1_ref : (Din_p, Hp) bf16  fc1 weight with BN scale folded into columns
    b1_ref : (1, Hp)     f32   fc1 bias with BN shift folded in
    w2_ref : (Hp, Vp)    bf16  fc2 weight (zero-padded hidden rows)
    b2_ref : (1, Vp)     f32   fc2 bias (padded vocab cols hold -1e30)
    out_ref: (tm, Vp)          log-probabilities
    """
    # fc1 + BatchNorm1d(eval): the BN affine is already folded into w1/b1.
    h = jnp.dot(x_ref[...], w1_ref[...],
                preferred_element_type=jnp.float32) + b1_ref[...]

    # activation_function = ReLU; dropout1 is identity in eval mode.
    h = jnp.maximum(h, 0.0)

    # fc2 (bf16 MXU feed, f32 accumulate).
    logits = jnp.dot(h.astype(jnp.bfloat16), w2_ref[...],
                     preferred_element_type=jnp.float32) + b2_ref[...]

    # log_softmax along dim=1 (vocab axis), numerically stable, f32 throughout.
    m = jnp.max(logits, axis=1, keepdims=True)
    shifted = logits - m
    lse = jnp.log(jnp.sum(jnp.exp(shifted), axis=1, keepdims=True))
    out_ref[...] = (shifted - lse).astype(out_ref.dtype)


# ------------------------- One-time parameter prep ----------------------------
def prepare_params(params, eps=1e-5):
    """Fold BN into fc1, pad Din/H/V to multiples of 128, cast matmul operands to bf16.

    Run once at load time; the returned arrays are reused by every forward call.
    """
    emb = params["embedding"]                                   # (V, E) f32
    V, E = emb.shape
    Din, H = params["w1"].shape

    # Fold BatchNorm1d (eval, running stats) into fc1.
    scale = params["bn_gamma"] / jnp.sqrt(params["bn_running_var"] + eps)   # (H,)
    shift = params["bn_beta"] - params["bn_running_mean"] * scale           # (H,)
    w1f = params["w1"] * scale[None, :]                                     # (Din, H)
    b1f = params["b1"] * scale + shift                                      # (H,)
    w2 = params["w2"]                                                       # (H, V)
    b2 = params["b2"]                                                       # (V,)

    Din_p = _round_up(Din, 128)
    Hp = _round_up(H, 128)
    Vp = _round_up(V, 128)

    if Din_p != Din:                       # lane-dense x loads / full MXU K tile
        w1f = jnp.pad(w1f, ((0, Din_p - Din), (0, 0)))
    if Hp != H:
        w1f = jnp.pad(w1f, ((0, 0), (0, Hp - H)))
        b1f = jnp.pad(b1f, (0, Hp - H))
        w2 = jnp.pad(w2, ((0, Hp - H), (0, 0)))
    if Vp != V:
        w2 = jnp.pad(w2, ((0, 0), (0, Vp - V)))
        # Padded vocab columns get -1e30 bias so they vanish under log_softmax.
        b2 = jnp.pad(b2, (0, Vp - V), constant_values=-1e30)

    prepared = {
        "emb_bf": emb.astype(jnp.bfloat16),                 # bf16 table -> bf16 gather
        "w1_bf": w1f.astype(jnp.bfloat16),
        "b1_f32": b1f.reshape(1, Hp).astype(jnp.float32),
        "w2_bf": w2.astype(jnp.bfloat16),
        "b2_f32": b2.reshape(1, Vp).astype(jnp.float32),
    }
    dims = {"V": V, "E": E, "H": H, "Din": Din, "Din_p": Din_p, "Hp": Hp, "Vp": Vp}
    return prepared, dims


# ------------------------------ Forward wrapper --------------------------------
def improved_mlp_forward(tokens, prepared, dims, *, tm=None, vmem_limit_bytes=None,
                         out_dtype=jnp.float32):
    """tokens: (B, C) int32 ids.  Returns (B, V) log-probs (eval-mode forward)."""
    B, C = tokens.shape
    V, E = dims["V"], dims["E"]
    Din, Din_p, Hp, Vp = dims["Din"], dims["Din_p"], dims["Hp"], dims["Vp"]
    assert Din == E * C, "context_size/embedding_dim mismatch with fc1"

    tm_def, vmem_def = _device_defaults()
    if tm is None:
        tm = tm_def
    if vmem_limit_bytes is None:
        vmem_limit_bytes = vmem_def

    tm = _pick_tm(B, tm)
    Bp = _round_up(max(B, 1), tm)

    # Embedding lookup from the pre-cast bf16 table: the (B, Din) activation is
    # materialized once, already in bf16.
    # TODO(synk): fuse the gather in-kernel (scalar-prefetched token ids + pl.Element
    #             row gather) to drop this HBM round trip entirely.
    x = jnp.take(prepared["emb_bf"], tokens.reshape(-1), axis=0).reshape(B, Din)
    if Din_p != Din or Bp != B:
        x = jnp.pad(x, ((0, Bp - B), (0, Din_p - Din)))

    grid = (Bp // tm,)

    out_bytes = Bp * Vp * jnp.dtype(out_dtype).itemsize
    cost = pl.CostEstimate(
        flops=2 * Bp * (Din_p * Hp + Hp * Vp),
        transcendentals=Bp * Vp,
        bytes_accessed=(Bp * Din_p * 2 + Din_p * Hp * 2 + Hp * Vp * 2
                        + (Hp + Vp) * 4 + out_bytes),
    )

    resident = pl.Buffered(1)   # block index never changes -> single buffer, half VMEM

    out = pl.pallas_call(
        improved_mlp_kernel,
        out_shape=jax.ShapeDtypeStruct((Bp, Vp), out_dtype),
        grid_spec=pltpu.PrefetchScalarGridSpec(
            num_scalar_prefetch=0,
            grid=grid,
            in_specs=[
                pl.BlockSpec((tm, Din_p), lambda i: (i, 0)),        # x: streamed tiles
                pl.BlockSpec((Din_p, Hp), lambda i: (0, 0),
                             pipeline_mode=resident),               # w1 (BN folded)
                pl.BlockSpec((1, Hp), lambda i: (0, 0),
                             pipeline_mode=resident),               # b1 (BN folded)
                # TODO(synk): for large vocab (esp. v7x 64 MiB VMEM), add a vocab grid
                #             axis streaming (Hp, tn) w2 blocks + online logsumexp.
                pl.BlockSpec((Hp, Vp), lambda i: (0, 0),
                             pipeline_mode=resident),               # w2, resident
                pl.BlockSpec((1, Vp), lambda i: (0, 0),
                             pipeline_mode=resident),               # b2
            ],
            out_specs=pl.BlockSpec((tm, Vp), lambda i: (i, 0)),
        ),
        compiler_params=pltpu.CompilerParams(
            dimension_semantics=("parallel",),      # batch tiles independent
            vmem_limit_bytes=vmem_limit_bytes,
        ),
        cost_estimate=cost,
    )(x, prepared["w1_bf"], prepared["b1_f32"], prepared["w2_bf"], prepared["b2_f32"])

    return out[:B, :V]


# --------------------------- Pure-JAX reference --------------------------------
def improved_mlp_reference(tokens, params, eps=1e-5):
    emb = params["embedding"]
    B, _ = tokens.shape
    x = jnp.take(emb, tokens.reshape(-1), axis=0).reshape(B, -1)
    h = x @ params["w1"] + params["b1"]
    scale = params["bn_gamma"] / jnp.sqrt(params["bn_running_var"] + eps)
    h = (h - params["bn_running_mean"]) * scale + params["bn_beta"]
    h = jnp.maximum(h, 0.0)
    logits = h @ params["w2"] + params["b2"]
    return jax.nn.log_softmax(logits, axis=1)


# --------------------------- Parameter init -----------------------------------
def init_params(key, vocab_size, embedding_dim, hidden_dim, context_size):
    k_emb, k_w1, k_b1, k_w2, k_b2, k_rm, k_rv = jax.random.split(key, 7)
    d_in = embedding_dim * context_size
    return {
        "embedding": jax.random.normal(k_emb, (vocab_size, embedding_dim), jnp.float32) * 0.1,
        "w1": jax.random.normal(k_w1, (d_in, hidden_dim), jnp.float32) * (1.0 / jnp.sqrt(d_in)),
        "b1": jax.random.normal(k_b1, (hidden_dim,), jnp.float32) * 0.01,
        "bn_gamma": jnp.ones((hidden_dim,), jnp.float32),
        "bn_beta": jnp.zeros((hidden_dim,), jnp.float32),
        "bn_running_mean": jax.random.normal(k_rm, (hidden_dim,), jnp.float32) * 0.05,
        "bn_running_var": jnp.abs(jax.random.normal(k_rv, (hidden_dim,), jnp.float32)) * 0.1 + 1.0,
        "w2": jax.random.normal(k_w2, (hidden_dim, vocab_size), jnp.float32) * (1.0 / jnp.sqrt(hidden_dim)),
        "b2": jax.random.normal(k_b2, (vocab_size,), jnp.float32) * 0.01,
    }


# --------------------------------- main ----------------------------------------
if __name__ == "__main__":
    # Small shapes consistent with the module's forward; chosen to exercise every
    # padding path (Din=320->384, H=64->128, V=100->128) and batch tiling (2 tiles).
    vocab_size = 100
    embedding_dim = 64
    hidden_dim = 64
    context_size = 5
    batch = 200

    key = jax.random.PRNGKey(0)
    k_params, k_tokens = jax.random.split(key)

    params = init_params(k_params, vocab_size, embedding_dim, hidden_dim, context_size)
    tokens = jax.random.randint(k_tokens, (batch, context_size), 0, vocab_size, dtype=jnp.int32)

    # One-time prep (BN fold + pad + bf16 cast); reused by every forward call.
    prepared, dims = prepare_params(params)
    prepared = jax.block_until_ready(prepared)

    fwd = jax.jit(lambda toks, prep: improved_mlp_forward(toks, prep, dims))
    log_probs = jax.block_until_ready(fwd(tokens, prepared))

    assert log_probs.shape == (batch, vocab_size)

    # Sanity 1: log_softmax rows sum to ~1 in prob space.
    row_sums = jnp.exp(log_probs.astype(jnp.float32)).sum(axis=1)
    assert bool(jnp.all(jnp.abs(row_sums - 1.0) < 1e-3))

    # Sanity 2: matches the f32 reference within bf16-matmul tolerance.
    ref = improved_mlp_reference(tokens, params)
    max_err = float(jnp.max(jnp.abs(log_probs.astype(jnp.float32) - ref)))
    assert max_err < 0.1, f"max abs err vs reference: {max_err}"

    print("KERNEL_OK")
</pallas_src>

<mosaic_0001>
module attributes {stable_mosaic.version = 11 : i64} {
  func.func @improved_mlp_kernel(%arg0: i32, %arg1: memref<128x384xbf16, #tpu.memory_space<vmem>>, %arg2: memref<384x128xbf16, #tpu.memory_space<vmem>>, %arg3: memref<1x128xf32, #tpu.memory_space<vmem>>, %arg4: memref<128x128xbf16, #tpu.memory_space<vmem>>, %arg5: memref<1x128xf32, #tpu.memory_space<vmem>>, %arg6: memref<128x128xf32, #tpu.memory_space<vmem>>) attributes {dimension_semantics = [#tpu.dimension_semantics<parallel>], iteration_bounds = array<i64: 2>, scalar_prefetch = 0 : i64, scratch_operands = 0 : i64, tpu.core_type = #tpu.core_type<tc>, window_params = [{transform_indices = @transform_0, window_bounds = array<i64: 128, 384>}, {pipeline_mode = #tpu.pipeline_mode<synchronous>, transform_indices = @transform_1, window_bounds = array<i64: 384, 128>}, {pipeline_mode = #tpu.pipeline_mode<synchronous>, transform_indices = @transform_2, window_bounds = array<i64: 1, 128>}, {pipeline_mode = #tpu.pipeline_mode<synchronous>, transform_indices = @transform_3, window_bounds = array<i64: 128, 128>}, {pipeline_mode = #tpu.pipeline_mode<synchronous>, transform_indices = @transform_4, window_bounds = array<i64: 1, 128>}, {transform_indices = @transform_5, window_bounds = array<i64: 128, 128>}]} {
    %c0 = arith.constant 0 : index
    %c0_0 = arith.constant 0 : index
    %0 = vector.load %arg1[%c0, %c0_0] : memref<128x384xbf16, #tpu.memory_space<vmem>>, vector<128x384xbf16>
    %c0_1 = arith.constant 0 : index
    %c0_2 = arith.constant 0 : index
    %1 = vector.load %arg2[%c0_1, %c0_2] : memref<384x128xbf16, #tpu.memory_space<vmem>>, vector<384x128xbf16>
    %cst = arith.constant dense<0.000000e+00> : vector<128x128xf32>
    %2 = tpu.matmul %0, %1, %cst {dimension_numbers = #tpu.dot_dimension_numbers<[1], [0], [0], [1], [0, 0, 1, 1], [], []>} : vector<128x384xbf16>, vector<384x128xbf16>, vector<128x128xf32> -> vector<128x128xf32>
    %c0_3 = arith.constant 0 : index
    %c0_4 = arith.constant 0 : index
    %3 = vector.load %arg3[%c0_3, %c0_4] : memref<1x128xf32, #tpu.memory_space<vmem>>, vector<1x128xf32>
    %4 = vector.broadcast %3 : vector<1x128xf32> to vector<128x128xf32>
    %5 = arith.addf %2, %4 : vector<128x128xf32>
    %cst_5 = arith.constant 0.000000e+00 : f32
    %6 = vector.broadcast %cst_5 : f32 to vector<128x128xf32>
    %7 = arith.maximumf %5, %6 : vector<128x128xf32>
    %8 = arith.truncf %7 : vector<128x128xf32> to vector<128x128xbf16>
    %c0_6 = arith.constant 0 : index
    %c0_7 = arith.constant 0 : index
    %9 = vector.load %arg4[%c0_6, %c0_7] : memref<128x128xbf16, #tpu.memory_space<vmem>>, vector<128x128xbf16>
    %cst_8 = arith.constant dense<0.000000e+00> : vector<128x128xf32>
    %10 = tpu.matmul %8, %9, %cst_8 {dimension_numbers = #tpu.dot_dimension_numbers<[1], [0], [0], [1], [0, 0, 1, 1], [], []>} : vector<128x128xbf16>, vector<128x128xbf16>, vector<128x128xf32> -> vector<128x128xf32>
    %c0_9 = arith.constant 0 : index
    %c0_10 = arith.constant 0 : index
    %11 = vector.load %arg5[%c0_9, %c0_10] : memref<1x128xf32, #tpu.memory_space<vmem>>, vector<1x128xf32>
    %12 = vector.broadcast %11 : vector<1x128xf32> to vector<128x128xf32>
    %13 = arith.addf %10, %12 : vector<128x128xf32>
    %cst_11 = arith.constant dense<0xFF800000> : vector<128xf32>
    %14 = vector.multi_reduction <maximumf>, %13, %cst_11 [1] : vector<128x128xf32> to vector<128xf32>
    %15 = vector.shape_cast %14 : vector<128xf32> to vector<128x1xf32>
    %16 = vector.broadcast %15 : vector<128x1xf32> to vector<128x128xf32>
    %17 = arith.subf %13, %16 : vector<128x128xf32>
    %18 = math.exp %17 : vector<128x128xf32>
    %cst_12 = arith.constant dense<0.000000e+00> : vector<128xf32>
    %19 = vector.multi_reduction <add>, %18, %cst_12 [1] : vector<128x128xf32> to vector<128xf32>
    %20 = vector.shape_cast %19 : vector<128xf32> to vector<128x1xf32>
    %21 = math.log %20 : vector<128x1xf32>
    %22 = vector.broadcast %21 : vector<128x1xf32> to vector<128x128xf32>
    %23 = arith.subf %17, %22 : vector<128x128xf32>
    %c0_13 = arith.constant 0 : index
    %c0_14 = arith.constant 0 : index
    %24 = vector.load %arg6[%c0_13, %c0_14] : memref<128x128xf32, #tpu.memory_space<vmem>>, vector<128x128xf32>
    tpu.vector_store %arg6[%c0_13, %c0_14], %23 {strides = array<i32>} : memref<128x128xf32, #tpu.memory_space<vmem>>, vector<128x128xf32>,
    return
  }
  func.func @transform_0(%arg0: i32) -> (i32, i32) {
    %c0_i32 = arith.constant 0 : i32
    %c0_i32_0 = arith.constant 0 : i32
    return %arg0, %c0_i32 : i32, i32
  }
  func.func @transform_1(%arg0: i32) -> (i32, i32) {
    %c0_i32 = arith.constant 0 : i32
    %c0_i32_0 = arith.constant 0 : i32
    %c0_i32_1 = arith.constant 0 : i32
    return %c0_i32, %c0_i32_0 : i32, i32
  }
  func.func @transform_2(%arg0: i32) -> (i32, i32) {
    %c0_i32 = arith.constant 0 : i32
    %c0_i32_0 = arith.constant 0 : i32
    %c0_i32_1 = arith.constant 0 : i32
    return %c0_i32, %c0_i32_0 : i32, i32
  }
  func.func @transform_3(%arg0: i32) -> (i32, i32) {
    %c0_i32 = arith.constant 0 : i32
    %c0_i32_0 = arith.constant 0 : i32
    %c0_i32_1 = arith.constant 0 : i32
    return %c0_i32, %c0_i32_0 : i32, i32
  }
  func.func @transform_4(%arg0: i32) -> (i32, i32) {
    %c0_i32 = arith.constant 0 : i32
    %c0_i32_0 = arith.constant 0 : i32
    %c0_i32_1 = arith.constant 0 : i32
    return %c0_i32, %c0_i32_0 : i32, i32
  }
  func.func @transform_5(%arg0: i32) -> (i32, i32) {
    %c0_i32 = arith.constant 0 : i32
    %c0_i32_0 = arith.constant 0 : i32
    return %arg0, %c0_i32 : i32, i32
  }
}

</mosaic_0001>

<llo_original>
// kernel: _lambda_.1
$region0: #{_lambda_.1}
  #allocation0 [shape = 'u32[]', space=smem, size = 0x4, offset = 0x4, fixed_abs, tag = 'smem constant byte address 0x4 - core index']
  #allocation1 [shape = 'u32[144,128]{1,0:T(1,128)}', space=vmem, size = 0x12000, scoped, tag = 'internal scratch']
  %s0 = inlined_call_operand.vmem [shape: bf16[256,384], index: 0, kind: input, shape index: {}]
  %s1 = inlined_call_operand.vmem [shape: bf16[384,128], index: 1, kind: input, shape index: {}]
  %s2 = inlined_call_operand.vmem [shape: f32[1,128], index: 2, kind: input, shape index: {}]
  %s3 = inlined_call_operand.vmem [shape: bf16[128,128], index: 3, kind: input, shape index: {}]
  %s4 = inlined_call_operand.vmem [shape: f32[1,128], index: 4, kind: input, shape index: {}]
  %s5 = inlined_call_operand.vmem [shape: f32[256,128], index: 5, kind: output, shape index: {}]
  %s6 = sld [smem:[#allocation0]]
  $region53: #{_lambda_.1} parent=0
    _
  %s8 = ssub.s32 1, %s6
  %s9 = scalar_select 0, %s8, %s6
  loop: start=0, step=1, limit=4
  $region2: #{_lambda_.1} parent=0 // loop_pre_header
    _
  $region3: #{_lambda_.1} parent=0 // loop_header
    %s11 = sphi 0, %s15
    %p12 = scmp.ge.s32.totalorder %s11, 4
    %s21 = sphi 0, %s23
    %s24 = sphi 0, %s21
    %s25 = sphi 0, %s24
    %s41 = sphi 0, %s25
    %s45 = sphi 0, %s45
    %s47 = sphi 0, %s45
    %s48 = sphi 0, %s47
    %s62 = sphi 0, %s48
    %s66 = sphi 0, %s66
    %s68 = sphi 0, %s66
    %s69 = sphi 0, %s68
    %s83 = sphi 0, %s69
    %s87 = sphi 0, %s87
    %s89 = sphi 0, %s87
    %s90 = sphi 0, %s89
    %s104 = sphi 0, %s90
    %s108 = sphi 0, %s108
    %s110 = sphi 0, %s108
    %s111 = sphi 0, %s110
    %s125 = sphi 0, %s111
    %s131 = sphi 0, %s133
    %s134 = sphi 0, %s131
    %s135 = sphi 0, %s134
    %s151 = sphi 0, %s135
  $region4: #{_lambda_.1} parent=0 // loop_header_branch
    %14 = sbr.rel (%p12) target = $region8
  $region5: #{_lambda_.1} parent=0 // loop_body
    %s16 = ssub.s32 %s11, 1
    %s17 = ssub.s32 %s11, 2
    %s18 = sadd.s32 %s11, 1
    %s19 = ssub.s32 %s11, %s18
    %p20 = scmp.eq.s32.totalorder %s19, 0
    %s22 = sadd.s32 %s21, 1
    %s23 = scalar_select %p20, %s21, %s22
    %p26 = pneg %p20
    %p27 = scmp.eq.s32.totalorder %s11, 1
    %p28 = por %p26, %p27
    %p29 = scmp.ne.s32.totalorder %s21, %s24
    %p30 = scmp.eq.s32.totalorder %s11, 0
    %p31 = por %p29, %p30
    %p32 = scmp.ne.s32.totalorder %s21, %s24
    %p33 = scmp.eq.s32.totalorder %s16, 1
    %p34 = por %p32, %p33
    %p35 = scmp.ne.s32.totalorder %s24, %s25
    %p36 = scmp.eq.s32.totalorder %s16, 0
    %p37 = por %p35, %p36
    %p38 = scmp.ne.s32.totalorder %s24, %s25
    %p39 = scmp.eq.s32.totalorder %s17, 1
    %p40 = por %p38, %p39
    %p42 = scmp.ne.s32.totalorder %s25, %s41
    %p43 = scmp.eq.s32.totalorder %s17, 0
    %p44 = por %p42, %p43
    %s46 = sadd.s32 %s45, 1
    %p49 = scmp.eq.s32.totalorder %s11, 1
    %p50 = scmp.ne.s32.totalorder %s45, %s47
    %p51 = scmp.eq.s32.totalorder %s11, 0
    %p52 = por %p50, %p51
    %p53 = scmp.ne.s32.totalorder %s45, %s47
    %p54 = scmp.eq.s32.totalorder %s16, 1
    %p55 = por %p53, %p54
    %p56 = scmp.ne.s32.totalorder %s47, %s48
    %p57 = scmp.eq.s32.totalorder %s16, 0
    %p58 = por %p56, %p57
    %p59 = scmp.ne.s32.totalorder %s47, %s48
    %p60 = scmp.eq.s32.totalorder %s17, 1
    %p61 = por %p59, %p60
    %p63 = scmp.ne.s32.totalorder %s48, %s62
    %p64 = scmp.eq.s32.totalorder %s17, 0
    %p65 = por %p63, %p64
    %s67 = sadd.s32 %s66, 1
    %p70 = scmp.eq.s32.totalorder %s11, 1
    %p71 = scmp.ne.s32.totalorder %s66, %s68
    %p72 = scmp.eq.s32.totalorder %s11, 0
    %p73 = por %p71, %p72
    %p74 = scmp.ne.s32.totalorder %s66, %s68
    %p75 = scmp.eq.s32.totalorder %s16, 1
    %p76 = por %p74, %p75
    %p77 = scmp.ne.s32.totalorder %s68, %s69
    %p78 = scmp.eq.s32.totalorder %s16, 0
    %p79 = por %p77, %p78
    %p80 = scmp.ne.s32.totalorder %s68, %s69
    %p81 = scmp.eq.s32.totalorder %s17, 1
    %p82 = por %p80, %p81
    %p84 = scmp.ne.s32.totalorder %s69, %s83
    %p85 = scmp.eq.s32.totalorder %s17, 0
    %p86 = por %p84, %p85
    %s88 = sadd.s32 %s87, 1
    %p91 = scmp.eq.s32.totalorder %s11, 1
    %p92 = scmp.ne.s32.totalorder %s87, %s89
    %p93 = scmp.eq.s32.totalorder %s11, 0
    %p94 = por %p92, %p93
    %p95 = scmp.ne.s32.totalorder %s87, %s89
    %p96 = scmp.eq.s32.totalorder %s16, 1
    %p97 = por %p95, %p96
    %p98 = scmp.ne.s32.totalorder %s89, %s90
    %p99 = scmp.eq.s32.totalorder %s16, 0
    %p100 = por %p98, %p99
    %p101 = scmp.ne.s32.totalorder %s89, %s90
    %p102 = scmp.eq.s32.totalorder %s17, 1
    %p103 = por %p101, %p102
    %p105 = scmp.ne.s32.totalorder %s90, %s104
    %p106 = scmp.eq.s32.totalorder %s17, 0
    %p107 = por %p105, %p106
    %s109 = sadd.s32 %s108, 1
    %p112 = scmp.eq.s32.totalorder %s11, 1
    %p113 = scmp.ne.s32.totalorder %s108, %s110
    %p114 = scmp.eq.s32.totalorder %s11, 0
    %p115 = por %p113, %p114
    %p116 = scmp.ne.s32.totalorder %s108, %s110
    %p117 = scmp.eq.s32.totalorder %s16, 1
    %p118 = por %p116, %p117
    %p119 = scmp.ne.s32.totalorder %s110, %s111
    %p120 = scmp.eq.s32.totalorder %s16, 0
    %p121 = por %p119, %p120
    %p122 = scmp.ne.s32.totalorder %s110, %s111
    %p123 = scmp.eq.s32.totalorder %s17, 1
    %p124 = por %p122, %p123
    %p126 = scmp.ne.s32.totalorder %s111, %s125
    %p127 = scmp.eq.s32.totalorder %s17, 0
    %p128 = por %p126, %p127
    %s129 = ssub.s32 %s11, %s18
    %p130 = scmp.eq.s32.totalorder %s129, 0
    %s132 = sadd.s32 %s131, 1
    %s133 = scalar_select %p130, %s131, %s132
    %p136 = pneg %p130
    %p137 = scmp.eq.s32.totalorder %s11, 1
    %p138 = por %p136, %p137
    %p139 = scmp.ne.s32.totalorder %s131, %s134
    %p140 = scmp.eq.s32.totalorder %s11, 0
    %p141 = por %p139, %p140
    %p142 = scmp.ne.s32.totalorder %s131, %s134
    %p143 = scmp.eq.s32.totalorder %s16, 1
    %p144 = por %p142, %p143
    %p145 = scmp.ne.s32.totalorder %s134, %s135
    %p146 = scmp.eq.s32.totalorder %s16, 0
    %p147 = por %p145, %p146
    %p148 = scmp.ne.s32.totalorder %s134, %s135
    %p149 = scmp.eq.s32.totalorder %s17, 1
    %p150 = por %p148, %p149
    %p152 = scmp.ne.s32.totalorder %s135, %s151
    %p153 = scmp.eq.s32.totalorder %s17, 0
    %p154 = por %p152, %p153
    %p155 = scmp.le.s32.totalorder 1, %s11
    %p156 = scmp.lt.s32.totalorder %s11, 3
    %p157 = pnand %p155, %p156
    %p158 = pneg %p157
    // Predicated region
    $region9: #{_lambda_.1} parent=5 // pred_check
      _
    $region10: #{_lambda_.1} parent=5 // pred_check_branch
      %160 = sbr.rel (%p157) target = $region12
    $region11: #{_lambda_.1} parent=5 // pred_region
      %s161 = ssub.s32 %s11, 1
      // Predicated region
      $region13: #{_lambda_.1} parent=11 // pred_check
        %p162 = pneg %p58
      $region14: #{_lambda_.1} parent=11 // pred_check_branch
        %164 = sbr.rel (%p162) target = $region16
      $region15: #{_lambda_.1} parent=11 // pred_region
        _
      $region16: #{_lambda_.1} parent=11 // pred_fallthru
        _
      // Predicated region
      $region17: #{_lambda_.1} parent=11 // pred_check
        %p165 = pneg %p79
      $region18: #{_lambda_.1} parent=11 // pred_check_branch
        %167 = sbr.rel (%p165) target = $region20
      $region19: #{_lambda_.1} parent=11 // pred_region
        _
      $region20: #{_lambda_.1} parent=11 // pred_fallthru
        _
      // Predicated region
      $region21: #{_lambda_.1} parent=11 // pred_check
        %p168 = pneg %p100
      $region22: #{_lambda_.1} parent=11 // pred_check_branch
        %170 = sbr.rel (%p168) target = $region24
      $region23: #{_lambda_.1} parent=11 // pred_region
        _
      $region24: #{_lambda_.1} parent=11 // pred_fallthru
        _
      // Predicated region
      $region25: #{_lambda_.1} parent=11 // pred_check
        %p171 = pneg %p121
      $region26: #{_lambda_.1} parent=11 // pred_check_branch
        %173 = sbr.rel (%p171) target = $region28
      $region27: #{_lambda_.1} parent=11 // pred_region
        _
      $region28: #{_lambda_.1} parent=11 // pred_fallthru
        _
    $region12: #{_lambda_.1} parent=5 // pred_fallthru
      _
    %p174 = scmp.lt.s32.totalorder %s11, 2
    // Predicated region
    $region29: #{_lambda_.1} parent=5 // pred_check
      %p175 = pneg %p174
    $region30: #{_lambda_.1} parent=5 // pred_check_branch
      %177 = sbr.rel (%p175) target = $region32
    $region31: #{_lambda_.1} parent=5 // pred_region
      // Predicated region
      $region33: #{_lambda_.1} parent=31 // pred_check
        %p178 = pneg %p31
      $region34: #{_lambda_.1} parent=31 // pred_check_branch
        %180 = sbr.rel (%p178) target = $region36
      $region35: #{_lambda_.1} parent=31 // pred_region
        %s181 = smul.u32 16, %s11
        %p182 = scmp.lt.s32.totalorder %s181, 31
        %s183 = scalar_select %p182, %s181, 31
        %s184 = smul.addr %s183, 3
        %s185 = smul.addr %s184, 4
        %s186 = scalar_lea.vmem %s0, %s185
        %s187 = smul.u32 16, %s11
      $region36: #{_lambda_.1} parent=31 // pred_fallthru
        _
    $region32: #{_lambda_.1} parent=5 // pred_fallthru
      _
    %p188 = scmp.le.s32.totalorder 1, %s11
    %p189 = scmp.lt.s32.totalorder %s11, 3
    %p190 = pnand %p188, %p189
    %p191 = pneg %p190
    // Predicated region
    $region37: #{_lambda_.1} parent=5 // pred_check
      _
    $region38: #{_lambda_.1} parent=5 // pred_check_branch
      %193 = sbr.rel (%p190) target = $region40
    $region39: #{_lambda_.1} parent=5 // pred_region
      %s194 = ssub.s32 %s11, 1
      %s195 = smul.u32 16, %s16
      %p196 = scmp.lt.s32.totalorder %s195, 31
      %s197 = scalar_select %p196, %s195, 31
      %s198 = smul.addr %s197, 3
      %s199 = smul.addr %s198, 4
      %s200 = scalar_lea.vmem %s0, %s199
      %p201 = pneg %p37
      %p202 = pneg %p34
      %p203 = pneg %p58
      %p204 = pneg %p55
      %p205 = pneg %p79
      %p206 = pneg %p76
      %p207 = pneg %p100
      %p208 = pneg %p97
      %p209 = pneg %p121
      %p210 = pneg %p118
      %p211 = pneg %p147
      %p212 = pneg %p144
      %s213 = smul.u32 16, %s16
      %p214 = scmp.lt.s32.totalorder %s213, 31
      %s215 = scalar_select %p214, %s213, 31
      %s216 = smul.addr %s215, 8
      %s217 = scalar_lea.vmem %s5, %s216
      %s218 = smul.u32 16, %s16
      %p219 = scmp.lt.s32.totalorder %s218, 31
      %s220 = scalar_select %p219, %s218, 31
      %s221 = smul.addr %s220, 3
      %s222 = smul.addr %s221, 4
      %s223 = scalar_lea.vmem %s0, %s222
      %s224 = smul.u32 16, %s16
      %s225 = smul.u32 16, %s16
      %p226 = scmp.lt.s32.totalorder %s225, 31
      %s227 = scalar_select %p226, %s225, 31
      %s228 = smul.addr %s227, 8
      %s229 = scalar_lea.vmem %s5, %s228
      %s230 = smul.u32 16, %s16
      %v232 = vld [vmem:[%s223] sm:$0xff]
      %v233 = vld [vmem:[%s223 + $0x8] sm:$0xf]
      %v234 = vld [vmem:[%s223 + $0xc] sm:$0xff]
      %v235 = vld [vmem:[%s223 + $0x14] sm:$0xf]
      %v236 = vld [vmem:[%s223 + $0x18] sm:$0xff]
      %v237 = vld [vmem:[%s223 + $0x20] sm:$0xf]
      %v238 = vld [vmem:[%s223 + $0x24] sm:$0xff]
      %v239 = vld [vmem:[%s223 + $0x2c] sm:$0xf]
      %v240 = vld [vmem:[%s223 + $0x30] sm:$0xff]
      %v241 = vld [vmem:[%s223 + $0x38] sm:$0xf]
      %v242 = vld [vmem:[%s223 + $0x3c] sm:$0xff]
      %v243 = vld [vmem:[%s223 + $0x44] sm:$0xf]
      %v244 = vld [vmem:[%s223 + $0x48] sm:$0xff]
      %v245 = vld [vmem:[%s223 + $0x50] sm:$0xf]
      %v246 = vld [vmem:[%s223 + $0x54] sm:$0xff]
      %v247 = vld [vmem:[%s223 + $0x5c] sm:$0xf]
      %v248 = vld [vmem:[%s223 + $0x60] sm:$0xff]
      %v249 = vld [vmem:[%s223 + $0x68] sm:$0xf]
      %v250 = vld [vmem:[%s223 + $0x6c] sm:$0xff]
      %v251 = vld [vmem:[%s223 + $0x74] sm:$0xf]
      %v252 = vld [vmem:[%s223 + $0x78] sm:$0xff]
      %v253 = vld [vmem:[%s223 + $0x80] sm:$0xf]
      %v254 = vld [vmem:[%s223 + $0x84] sm:$0xff]
      %v255 = vld [vmem:[%s223 + $0x8c] sm:$0xf]
      %v256 = vld [vmem:[%s223 + $0x90] sm:$0xff]
      %v257 = vld [vmem:[%s223 + $0x98] sm:$0xf]
      %v258 = vld [vmem:[%s223 + $0x9c] sm:$0xff]
      %v259 = vld [vmem:[%s223 + $0xa4] sm:$0xf]
      %v260 = vld [vmem:[%s223 + $0xa8] sm:$0xff]
      %v261 = vld [vmem:[%s223 + $0xb0] sm:$0xf]
      %v262 = vld [vmem:[%s223 + $0xb4] sm:$0xff]
      %v263 = vld [vmem:[%s223 + $0xbc] sm:$0xf]
      %v264 = vld [vmem:[%s1] sm:$0xf]
      %v265 = vld [vmem:[%s1 + $0x4] sm:$0xf]
      %v266 = vld [vmem:[%s1 + $0x8] sm:$0xf]
      %v267 = vld [vmem:[%s1 + $0xc] sm:$0xf]
      %v268 = vld [vmem:[%s1 + $0x10] sm:$0xf]
      %v269 = vld [vmem:[%s1 + $0x14] sm:$0xf]
      %v270 = vld [vmem:[%s1 + $0x18] sm:$0xf]
      %v271 = vld [vmem:[%s1 + $0x1c] sm:$0xf]
      %v272 = vld [vmem:[%s1 + $0x20] sm:$0xf]
      %v273 = vld [vmem:[%s1 + $0x24] sm:$0xf]
      %v274 = vld [vmem:[%s1 + $0x28] sm:$0xf]
      %v275 = vld [vmem:[%s1 + $0x2c] sm:$0xf]
      %v276 = vld [vmem:[%s1 + $0x30] sm:$0xf]
      %v277 = vld [vmem:[%s1 + $0x34] sm:$0xf]
      %v278 = vld [vmem:[%s1 + $0x38] sm:$0xf]
      %v279 = vld [vmem:[%s1 + $0x3c] sm:$0xf]
      %v280 = vld [vmem:[%s1 + $0x40] sm:$0xf]
      %v281 = vld [vmem:[%s1 + $0x44] sm:$0xf]
      %v282 = vld [vmem:[%s1 + $0x48] sm:$0xf]
      %v283 = vld [vmem:[%s1 + $0x4c] sm:$0xf]
      %v284 = vld [vmem:[%s1 + $0x50] sm:$0xf]
      %v285 = vld [vmem:[%s1 + $0x54] sm:$0xf]
      %v286 = vld [vmem:[%s1 + $0x58] sm:$0xf]
      %v287 = vld [vmem:[%s1 + $0x5c] sm:$0xf]
      %v288 = vld [vmem:[%s1 + $0x60] sm:$0xf]
      %v289 = vld [vmem:[%s1 + $0x64] sm:$0xf]
      %v290 = vld [vmem:[%s1 + $0x68] sm:$0xf]
      %v291 = vld [vmem:[%s1 + $0x6c] sm:$0xf]
      %v292 = vld [vmem:[%s1 + $0x70] sm:$0xf]
      %v293 = vld [vmem:[%s1 + $0x74] sm:$0xf]
      %v294 = vld [vmem:[%s1 + $0x78] sm:$0xf]
      %v295 = vld [vmem:[%s1 + $0x7c] sm:$0xf]
      %v296 = vld [vmem:[%s1 + $0x80] sm:$0xf]
      %v297 = vld [vmem:[%s1 + $0x84] sm:$0xf]
      %v298 = vld [vmem:[%s1 + $0x88] sm:$0xf]
      %v299 = vld [vmem:[%s1 + $0x8c] sm:$0xf]
      %v300 = vld [vmem:[%s1 + $0x90] sm:$0xf]
      %v301 = vld [vmem:[%s1 + $0x94] sm:$0xf]
      %v302 = vld [vmem:[%s1 + $0x98] sm:$0xf]
      %v303 = vld [vmem:[%s1 + $0x9c] sm:$0xf]
      %v304 = vld [vmem:[%s1 + $0xa0] sm:$0xf]
      %v305 = vld [vmem:[%s1 + $0xa4] sm:$0xf]
      %v306 = vld [vmem:[%s1 + $0xa8] sm:$0xf]
      %v307 = vld [vmem:[%s1 + $0xac] sm:$0xf]
      %v308 = vld [vmem:[%s1 + $0xb0] sm:$0xf]
      %v309 = vld [vmem:[%s1 + $0xb4] sm:$0xf]
      %v310 = vld [vmem:[%s1 + $0xb8] sm:$0xf]
      %v311 = vld [vmem:[%s1 + $0xbc] sm:$0xf]
      %v312 = vld [vmem:[%s2] sm:$0x1]
      %v314 = vlaneseq
      %v315 = vshrl.u32 %v314, 7
      %v316 = vsub.s32 0, %v315
      %v317 = vrot.slane %v312, %v316
      %v351 = vunpack.c.l.b16 %v232
      %v352 = vunpack.c.h.b16 %v232
      %v353 = vunpack.c.l.b16 %v233
      %v354 = vunpack.c.l.b16 %v234
      %v355 = vunpack.c.h.b16 %v234
      %v356 = vunpack.c.l.b16 %v235
      %v357 = vunpack.c.l.b16 %v236
      %v358 = vunpack.c.h.b16 %v236
      %v359 = vunpack.c.l.b16 %v237
      %v360 = vunpack.c.l.b16 %v238
      %v361 = vunpack.c.h.b16 %v238
      %v362 = vunpack.c.l.b16 %v239
      %v363 = vunpack.c.l.b16 %v240
      %v364 = vunpack.c.h.b16 %v240
      %v365 = vunpack.c.l.b16 %v241
      %v366 = vunpack.c.l.b16 %v242
      %v367 = vunpack.c.h.b16 %v242
      %v368 = vunpack.c.l.b16 %v243
      %v369 = vunpack.c.l.b16 %v244
      %v370 = vunpack.c.h.b16 %v244
      %v371 = vunpack.c.l.b16 %v245
      %v372 = vunpack.c.l.b16 %v246
      %v373 = vunpack.c.h.b16 %v246
      %v374 = vunpack.c.l.b16 %v247
      %v375 = vunpack.c.l.b16 %v248
      %v376 = vunpack.c.h.b16 %v248
      %v377 = vunpack.c.l.b16 %v249
      %v378 = vunpack.c.l.b16 %v250
      %v379 = vunpack.c.h.b16 %v250
      %v380 = vunpack.c.l.b16 %v251
      %v381 = vunpack.c.l.b16 %v252
      %v382 = vunpack.c.h.b16 %v252
      %v383 = vunpack.c.l.b16 %v253
      %v384 = vunpack.c.l.b16 %v254
      %v385 = vunpack.c.h.b16 %v254
      %v386 = vunpack.c.l.b16 %v255
      %v387 = vunpack.c.l.b16 %v256
      %v388 = vunpack.c.h.b16 %v256
      %v389 = vunpack.c.l.b16 %v257
      %v390 = vunpack.c.l.b16 %v258
      %v391 = vunpack.c.h.b16 %v258
      %v392 = vunpack.c.l.b16 %v259
      %v393 = vunpack.c.l.b16 %v260
      %v394 = vunpack.c.h.b16 %v260
      %v395 = vunpack.c.l.b16 %v261
      %v396 = vunpack.c.l.b16 %v262
      %v397 = vunpack.c.h.b16 %v262
      %v398 = vunpack.c.l.b16 %v263
      %v399 = vpack.c.b16 %v354, %v351
      %v400 = vpack.c.b16 %v355, %v352
      %v401 = vpack.c.b16 %v356, %v353
      %v402 = vpack.c.b16 %v360, %v357
      %v403 = vpack.c.b16 %v361, %v358
      %v404 = vpack.c.b16 %v362, %v359
      %v405 = vpack.c.b16 %v366, %v363
      %v406 = vpack.c.b16 %v367, %v364
      %v407 = vpack.c.b16 %v368, %v365
      %v408 = vpack.c.b16 %v372, %v369
      %v409 = vpack.c.b16 %v373, %v370
      %v410 = vpack.c.b16 %v374, %v371
      %v411 = vpack.c.b16 %v378, %v375
      %v412 = vpack.c.b16 %v379, %v376
      %v413 = vpack.c.b16 %v380, %v377
      %v414 = vpack.c.b16 %v384, %v381
      %v415 = vpack.c.b16 %v385, %v382
      %v416 = vpack.c.b16 %v386, %v383
      %v417 = vpack.c.b16 %v390, %v387
      %v418 = vpack.c.b16 %v391, %v388
      %v419 = vpack.c.b16 %v392, %v389
      %v420 = vpack.c.b16 %v396, %v393
      %v421 = vpack.c.b16 %v397, %v394
      %v422 = vpack.c.b16 %v398, %v395
      %v495 = vunpack.c.l.b16 %v264
      %v496 = vunpack.c.l.b16 %v265
      %v497 = vunpack.c.l.b16 %v266
      %v498 = vunpack.c.l.b16 %v267
      %v499 = vunpack.c.l.b16 %v268
      %v500 = vunpack.c.l.b16 %v269
      %v501 = vunpack.c.l.b16 %v270
      %v502 = vunpack.c.l.b16 %v271
      %v503 = vunpack.c.l.b16 %v272
      %v504 = vunpack.c.l.b16 %v273
      %v505 = vunpack.c.l.b16 %v274
      %v506 = vunpack.c.l.b16 %v275
      %v507 = vunpack.c.l.b16 %v276
      %v508 = vunpack.c.l.b16 %v277
      %v509 = vunpack.c.l.b16 %v278
      %v510 = vunpack.c.l.b16 %v279
      %v511 = vunpack.c.l.b16 %v280
      %v512 = vunpack.c.l.b16 %v281
      %v513 = vunpack.c.l.b16 %v282
      %v514 = vunpack.c.l.b16 %v283
      %v515 = vunpack.c.l.b16 %v284
      %v516 = vunpack.c.l.b16 %v285
      %v517 = vunpack.c.l.b16 %v286
      %v518 = vunpack.c.l.b16 %v287
      %v519 = vunpack.c.l.b16 %v288
      %v520 = vunpack.c.l.b16 %v289
      %v521 = vunpack.c.l.b16 %v290
      %v522 = vunpack.c.l.b16 %v291
      %v523 = vunpack.c.l.b16 %v292
      %v524 = vunpack.c.l.b16 %v293
      %v525 = vunpack.c.l.b16 %v294
      %v526 = vunpack.c.l.b16 %v295
      %v527 = vunpack.c.l.b16 %v296
      %v528 = vunpack.c.l.b16 %v297
      %v529 = vunpack.c.l.b16 %v298
      %v530 = vunpack.c.l.b16 %v299
      %v531 = vunpack.c.l.b16 %v300
      %v532 = vunpack.c.l.b16 %v301
      %v533 = vunpack.c.l.b16 %v302
      %v534 = vunpack.c.l.b16 %v303
      %v535 = vunpack.c.l.b16 %v304
      %v536 = vunpack.c.l.b16 %v305
      %v537 = vunpack.c.l.b16 %v306
      %v538 = vunpack.c.l.b16 %v307
      %v539 = vunpack.c.l.b16 %v308
      %v540 = vunpack.c.l.b16 %v309
      %v541 = vunpack.c.l.b16 %v310
      %v542 = vunpack.c.l.b16 %v311
      %v543 = vpack.c.b16 %v496, %v495
      %v544 = vpack.c.b16 %v498, %v497
      %v545 = vpack.c.b16 %v500, %v499
      %v546 = vpack.c.b16 %v502, %v501
      %v547 = vpack.c.b16 %v504, %v503
      %v548 = vpack.c.b16 %v506, %v505
      %v549 = vpack.c.b16 %v508, %v507
      %v550 = vpack.c.b16 %v510, %v509
      %v551 = vpack.c.b16 %v512, %v511
      %v552 = vpack.c.b16 %v514, %v513
      %v553 = vpack.c.b16 %v516, %v515
      %v554 = vpack.c.b16 %v518, %v517
      %v555 = vpack.c.b16 %v520, %v519
      %v556 = vpack.c.b16 %v522, %v521
      %v557 = vpack.c.b16 %v524, %v523
      %v558 = vpack.c.b16 %v526, %v525
      %v559 = vpack.c.b16 %v528, %v527
      %v560 = vpack.c.b16 %v530, %v529
      %v561 = vpack.c.b16 %v532, %v531
      %v562 = vpack.c.b16 %v534, %v533
      %v563 = vpack.c.b16 %v536, %v535
      %v564 = vpack.c.b16 %v538, %v537
      %v565 = vpack.c.b16 %v540, %v539
      %v566 = vpack.c.b16 %v542, %v541
      %591 = vmatprep.subr.bf16.mxu0 0
      %592 = vmatpush1.bf16.msra.mxu0 %v543
      %593 = vmatprep.subr.bf16.mxu0 0
      %594 = vmatpush1.bf16.msra.mxu0 %v544
      %595 = vmatprep.subr.bf16.mxu0 0
      %596 = vmatpush1.bf16.msra.mxu0 %v545
      %597 = vmatprep.subr.bf16.mxu0 0
      %598 = vmatpush1.bf16.msra.mxu0 %v546
      %599 = vmatprep.subr.bf16.mxu0 0
      %600 = vmatpush1.bf16.msra.mxu0 %v547
      %601 = vmatprep.subr.bf16.mxu0 0
      %602 = vmatpush1.bf16.msra.mxu0 %v548
      %603 = vmatprep.subr.bf16.mxu0 0
      %604 = vmatpush1.bf16.msra.mxu0 %v549
      %605 = vmatprep.subr.bf16.mxu0 0
      %606 = vmatpush1.bf16.msra.mxu0 %v550
      %607 = vmatprep.subr.bf16.mxu0 0
      %608 = vmatpush1.bf16.msra.mxu0 %v551
      %609 = vmatprep.subr.bf16.mxu0 0
      %610 = vmatpush1.bf16.msra.mxu0 %v552
      %611 = vmatprep.subr.bf16.mxu0 0
      %612 = vmatpush1.bf16.msra.mxu0 %v553
      %613 = vmatprep.subr.bf16.mxu0 0
      %614 = vmatpush1.bf16.msra.mxu0 %v554
      %615 = vmatprep.subr.bf16.mxu0 0
      %616 = vmatpush1.bf16.msra.mxu0 %v555
      %617 = vmatprep.subr.bf16.mxu0 0
      %618 = vmatpush1.bf16.msra.mxu0 %v556
      %619 = vmatprep.subr.bf16.mxu0 0
      %620 = vmatpush1.bf16.msra.mxu0 %v557
      %621 = vmatprep.subr.bf16.mxu0 0
      %622 = vmatpush1.bf16.msra.mxu0 %v558
      %623 = vmatprep.mubr.bf16.mxu0 %v400
      %624 = vmatmul.mubr.bf16.gmra.mrb[0].mxu0 %v399
      %v625 = vpop.f32.mrb[0].mxu0
      %v626 = vadd.f32 %v317, %v625
      %v627 = vpop.f32.mrb[0].mxu0
      %v628 = vpop.f32.mrb[0].mxu0
      %v629 = vadd.f32 %v317, %v628
      %v630 = vpop.f32.mrb[0].mxu0
      %631 = vmatprep.mubr.bf16.mxu0 %v403
      %632 = vmatmul.mubr.bf16.gmra.mrb[0].mxu0 %v402
      %v633 = vpop.f32.mrb[0].mxu0
      %v634 = vadd.f32 %v317, %v633
      %v635 = vpop.f32.mrb[0].mxu0
      %v636 = vpop.f32.mrb[0].mxu0
      %v637 = vadd.f32 %v317, %v636
      %v638 = vpop.f32.mrb[0].mxu0
      %639 = vmatprep.mubr.bf16.mxu0 %v406
      %640 = vmatmul.mubr.bf16.gmra.mrb[0].mxu0 %v405
      %v641 = vpop.f32.mrb[0].mxu0
      %v642 = vadd.f32 %v317, %v641
      %v643 = vpop.f32.mrb[0].mxu0
      %v644 = vpop.f32.mrb[0].mxu0
      %v645 = vadd.f32 %v317, %v644
      %v646 = vpop.f32.mrb[0].mxu0
      %647 = vmatprep.mubr.bf16.mxu0 %v409
      %648 = vmatmul.mubr.bf16.gmra.mrb[0].mxu0 %v408
      %v649 = vpop.f32.mrb[0].mxu0
      %v650 = vadd.f32 %v317, %v649
      %v651 = vpop.f32.mrb[0].mxu0
      %v652 = vpop.f32.mrb[0].mxu0
      %v653 = vadd.f32 %v317, %v652
      %v654 = vpop.f32.mrb[0].mxu0
      %655 = vmatprep.mubr.bf16.mxu0 %v412
      %656 = vmatmul.mubr.bf16.gmra.mrb[0].mxu0 %v411
      %v657 = vpop.f32.mrb[0].mxu0
      %v658 = vadd.f32 %v317, %v657
      %v659 = vpop.f32.mrb[0].mxu0
      %v660 = vpop.f32.mrb[0].mxu0
      %v661 = vadd.f32 %v317, %v660
      %v662 = vpop.f32.mrb[0].mxu0
      %663 = vmatprep.mubr.bf16.mxu0 %v415
      %664 = vmatmul.mubr.bf16.gmra.mrb[0].mxu0 %v414
      %v665 = vpop.f32.mrb[0].mxu0
      %v666 = vadd.f32 %v317, %v665
      %v667 = vpop.f32.mrb[0].mxu0
      %v668 = vpop.f32.mrb[0].mxu0
      %v669 = vadd.f32 %v317, %v668
      %v670 = vpop.f32.mrb[0].mxu0
      %671 = vmatprep.mubr.bf16.mxu0 %v418
      %672 = vmatmul.mubr.bf16.gmra.mrb[0].mxu0 %v417
      %v673 = vpop.f32.mrb[0].mxu0
      %v674 = vadd.f32 %v317, %v673
      %v675 = vpop.f32.mrb[0].mxu0
      %v676 = vpop.f32.mrb[0].mxu0
      %v677 = vadd.f32 %v317, %v676
      %v678 = vpop.f32.mrb[0].mxu0
      %679 = vmatprep.mubr.bf16.mxu0 %v421
      %680 = vmatmul.mubr.bf16.gmra.mrb[0].mxu0 %v420
      %v681 = vpop.f32.mrb[0].mxu0
      %v682 = vadd.f32 %v317, %v681
      %v683 = vpop.f32.mrb[0].mxu0
      %v684 = vpop.f32.mrb[0].mxu0
      %v685 = vadd.f32 %v317, %v684
      %v686 = vpop.f32.mrb[0].mxu0
      %687 = vdwg.mxu0
      %688 = vmatprep.subr.bf16.mxu0 0
      %689 = vmatpush1.bf16.msra.mxu0 %v559
      %690 = vmatprep.subr.bf16.mxu0 0
      %691 = vmatpush1.bf16.msra.mxu0 %v560
      %692 = vmatprep.subr.bf16.mxu0 0
      %693 = vmatpush1.bf16.msra.mxu0 %v561
      %694 = vmatprep.subr.bf16.mxu0 0
      %695 = vmatpush1.bf16.msra.mxu0 %v562
      %696 = vmatprep.subr.bf16.mxu0 0
      %697 = vmatpush1.bf16.msra.mxu0 %v563
      %698 = vmatprep.subr.bf16.mxu0 0
      %699 = vmatpush1.bf16.msra.mxu0 %v564
      %700 = vmatprep.subr.bf16.mxu0 0
      %701 = vmatpush1.bf16.msra.mxu0 %v565
      %702 = vmatprep.subr.bf16.mxu0 0
      %703 = vmatpush1.bf16.msra.mxu0 %v566
      %704 = vmatprep.subr.bf16.mxu0 0
      %705 = vmatpush1.bf16.msra.mxu0 0
      %706 = vmatprep.subr.bf16.mxu0 0
      %707 = vmatpush1.bf16.msra.mxu0 0
      %708 = vmatprep.subr.bf16.mxu0 0
      %709 = vmatpush1.bf16.msra.mxu0 0
      %710 = vmatprep.subr.bf16.mxu0 0
      %711 = vmatpush1.bf16.msra.mxu0 0
      %712 = vmatprep.subr.bf16.mxu0 0
      %713 = vmatpush1.bf16.msra.mxu0 0
      %714 = vmatprep.subr.bf16.mxu0 0
      %715 = vmatpush1.bf16.msra.mxu0 0
      %716 = vmatprep.subr.bf16.mxu0 0
      %717 = vmatpush1.bf16.msra.mxu0 0
      %718 = vmatprep.subr.bf16.mxu0 0
      %719 = vmatpush1.bf16.msra.mxu0 0
      %720 = vmatprep.mubr.bf16.mxu0 0
      %721 = vmatmul.mubr.bf16.gmra.mrb[0].mxu0 %v401
      %v722 = vpop.f32.mrb[0].mxu0
      %v723 = vadd.f32 %v626, %v722
      %v724 = vpop.f32.mrb[0].mxu0
      %v725 = vpop.f32.mrb[0].mxu0
      %v726 = vadd.f32 %v629, %v725
      %v727 = vpop.f32.mrb[0].mxu0
      %728 = vmatprep.mubr.bf16.mxu0 0
      %729 = vmatmul.mubr.bf16.gmra.mrb[0].mxu0 %v404
      %v730 = vpop.f32.mrb[0].mxu0
      %v731 = vadd.f32 %v634, %v730
      %v732 = vpop.f32.mrb[0].mxu0
      %v733 = vpop.f32.mrb[0].mxu0
      %v734 = vadd.f32 %v637, %v733
      %v735 = vpop.f32.mrb[0].mxu0
      %736 = vmatprep.mubr.bf16.mxu0 0
      %737 = vmatmul.mubr.bf16.gmra.mrb[0].mxu0 %v407
      %v738 = vpop.f32.mrb[0].mxu0
      %v739 = vadd.f32 %v642, %v738
      %v740 = vpop.f32.mrb[0].mxu0
      %v741 = vpop.f32.mrb[0].mxu0
      %v742 = vadd.f32 %v645, %v741
      %v743 = vpop.f32.mrb[0].mxu0
      %744 = vmatprep.mubr.bf16.mxu0 0
      %745 = vmatmul.mubr.bf16.gmra.mrb[0].mxu0 %v410
      %v746 = vpop.f32.mrb[0].mxu0
      %v747 = vadd.f32 %v650, %v746
      %v748 = vpop.f32.mrb[0].mxu0
      %v749 = vpop.f32.mrb[0].mxu0
      %v750 = vadd.f32 %v653, %v749
      %v751 = vpop.f32.mrb[0].mxu0
      %752 = vmatprep.mubr.bf16.mxu0 0
      %753 = vmatmul.mubr.bf16.gmra.mrb[0].mxu0 %v413
      %v754 = vpop.f32.mrb[0].mxu0
      %v755 = vadd.f32 %v658, %v754
      %v756 = vpop.f32.mrb[0].mxu0
      %v757 = vpop.f32.mrb[0].mxu0
      %v758 = vadd.f32 %v661, %v757
      %v759 = vpop.f32.mrb[0].mxu0
      %760 = vmatprep.mubr.bf16.mxu0 0
      %761 = vmatmul.mubr.bf16.gmra.mrb[0].mxu0 %v416
      %v762 = vpop.f32.mrb[0].mxu0
      %v763 = vadd.f32 %v666, %v762
      %v764 = vpop.f32.mrb[0].mxu0
      %v765 = vpop.f32.mrb[0].mxu0
      %v766 = vadd.f32 %v669, %v765
      %v767 = vpop.f32.mrb[0].mxu0
      %768 = vmatprep.mubr.bf16.mxu0 0
      %769 = vmatmul.mubr.bf16.gmra.mrb[0].mxu0 %v419
      %v770 = vpop.f32.mrb[0].mxu0
      %v771 = vadd.f32 %v674, %v770
      %v772 = vpop.f32.mrb[0].mxu0
      %v773 = vpop.f32.mrb[0].mxu0
      %v774 = vadd.f32 %v677, %v773
      %v775 = vpop.f32.mrb[0].mxu0
      %776 = vmatprep.mubr.bf16.mxu0 0
      %777 = vmatmul.mubr.bf16.gmra.mrb[0].mxu0 %v422
      %v778 = vpop.f32.mrb[0].mxu0
      %v779 = vadd.f32 %v682, %v778
      %v780 = vpop.f32.mrb[0].mxu0
      %v781 = vpop.f32.mrb[0].mxu0
      %v782 = vadd.f32 %v685, %v781
      %v783 = vpop.f32.mrb[0].mxu0
      %784 = vdwg.mxu0
      %v785 = vmax.f32 %v723, 0.0
      %v786 = vmax.f32 %v726, 0.0
      %v787 = vmax.f32 %v731, 0.0
      %v788 = vmax.f32 %v734, 0.0
      %v789 = vmax.f32 %v739, 0.0
      %v790 = vmax.f32 %v742, 0.0
      %v791 = vmax.f32 %v747, 0.0
      %v792 = vmax.f32 %v750, 0.0
      %v793 = vmax.f32 %v755, 0.0
      %v794 = vmax.f32 %v758, 0.0
      %v795 = vmax.f32 %v763, 0.0
      %v796 = vmax.f32 %v766, 0.0
      %v797 = vmax.f32 %v771, 0.0
      %v798 = vmax.f32 %v774, 0.0
      %v799 = vmax.f32 %v779, 0.0
      %v800 = vmax.f32 %v782, 0.0
      %v801 = vpack.c.bf16 %v786, %v785
      %v802 = vpack.c.bf16 %v788, %v787
      %v803 = vpack.c.bf16 %v790, %v789
      %v804 = vpack.c.bf16 %v792, %v791
      %v805 = vpack.c.bf16 %v794, %v793
      %v806 = vpack.c.bf16 %v796, %v795
      %v807 = vpack.c.bf16 %v798, %v797
      %v808 = vpack.c.bf16 %v800, %v799
      %v809 = vld [vmem:[%s3] sm:$0xf]
      %v810 = vld [vmem:[%s3 + $0x4] sm:$0xf]
      %v811 = vld [vmem:[%s3 + $0x8] sm:$0xf]
      %v812 = vld [vmem:[%s3 + $0xc] sm:$0xf]
      %v813 = vld [vmem:[%s3 + $0x10] sm:$0xf]
      %v814 = vld [vmem:[%s3 + $0x14] sm:$0xf]
      %v815 = vld [vmem:[%s3 + $0x18] sm:$0xf]
      %v816 = vld [vmem:[%s3 + $0x1c] sm:$0xf]
      %v817 = vld [vmem:[%s3 + $0x20] sm:$0xf]
      %v818 = vld [vmem:[%s3 + $0x24] sm:$0xf]
      %v819 = vld [vmem:[%s3 + $0x28] sm:$0xf]
      %v820 = vld [vmem:[%s3 + $0x2c] sm:$0xf]
      %v821 = vld [vmem:[%s3 + $0x30] sm:$0xf]
      %v822 = vld [vmem:[%s3 + $0x34] sm:$0xf]
      %v823 = vld [vmem:[%s3 + $0x38] sm:$0xf]
      %v824 = vld [vmem:[%s3 + $0x3c] sm:$0xf]
      %v825 = vld [vmem:[%s4] sm:$0x1]
      %v827 = vlaneseq
      %v828 = vshrl.u32 %v827, 7
      %v829 = vsub.s32 0, %v828
      %v830 = vrot.slane %v825, %v829
      %v848 = vunpack.c.l.b16 %v809
      %v849 = vunpack.c.l.b16 %v810
      %v850 = vunpack.c.l.b16 %v811
      %v851 = vunpack.c.l.b16 %v812
      %v852 = vunpack.c.l.b16 %v813
      %v853 = vunpack.c.l.b16 %v814
      %v854 = vunpack.c.l.b16 %v815
      %v855 = vunpack.c.l.b16 %v816
      %v856 = vunpack.c.l.b16 %v817
      %v857 = vunpack.c.l.b16 %v818
      %v858 = vunpack.c.l.b16 %v819
      %v859 = vunpack.c.l.b16 %v820
      %v860 = vunpack.c.l.b16 %v821
      %v861 = vunpack.c.l.b16 %v822
      %v862 = vunpack.c.l.b16 %v823
      %v863 = vunpack.c.l.b16 %v824
      %v864 = vpack.c.b16 %v849, %v848
      %v865 = vpack.c.b16 %v851, %v850
      %v866 = vpack.c.b16 %v853, %v852
      %v867 = vpack.c.b16 %v855, %v854
      %v868 = vpack.c.b16 %v857, %v856
      %v869 = vpack.c.b16 %v859, %v858
      %v870 = vpack.c.b16 %v861, %v860
      %v871 = vpack.c.b16 %v863, %v862
      %880 = vmatprep.subr.bf16.mxu0 0
      %881 = vmatpush1.bf16.msra.mxu0 %v864
      %882 = vmatprep.subr.bf16.mxu0 0
      %883 = vmatpush1.bf16.msra.mxu0 %v865
      %884 = vmatprep.subr.bf16.mxu0 0
      %885 = vmatpush1.bf16.msra.mxu0 %v866
      %886 = vmatprep.subr.bf16.mxu0 0
      %887 = vmatpush1.bf16.msra.mxu0 %v867
      %888 = vmatprep.subr.bf16.mxu0 0
      %889 = vmatpush1.bf16.msra.mxu0 %v868
      %890 = vmatprep.subr.bf16.mxu0 0
      %891 = vmatpush1.bf16.msra.mxu0 %v869
      %892 = vmatprep.subr.bf16.mxu0 0
      %893 = vmatpush1.bf16.msra.mxu0 %v870
      %894 = vmatprep.subr.bf16.mxu0 0
      %895 = vmatpush1.bf16.msra.mxu0 %v871
      %896 = vmatprep.subr.bf16.mxu0 0
      %897 = vmatpush1.bf16.msra.mxu0 0
      %898 = vmatprep.subr.bf16.mxu0 0
      %899 = vmatpush1.bf16.msra.mxu0 0
      %900 = vmatprep.subr.bf16.mxu0 0
      %901 = vmatpush1.bf16.msra.mxu0 0
      %902 = vmatprep.subr.bf16.mxu0 0
      %903 = vmatpush1.bf16.msra.mxu0 0
      %904 = vmatprep.subr.bf16.mxu0 0
      %905 = vmatpush1.bf16.msra.mxu0 0
      %906 = vmatprep.subr.bf16.mxu0 0
      %907 = vmatpush1.bf16.msra.mxu0 0
      %908 = vmatprep.subr.bf16.mxu0 0
      %909 = vmatpush1.bf16.msra.mxu0 0
      %910 = vmatprep.subr.bf16.mxu0 0
      %911 = vmatpush1.bf16.msra.mxu0 0
      %912 = vmatprep.mubr.bf16.mxu0 0
      %913 = vmatmul.mubr.bf16.gmra.mrb[0].mxu0 %v801
      %v914 = vpop.f32.mrb[0].mxu0
      %v915 = vadd.f32 %v830, %v914
      %v916 = vpop.f32.mrb[0].mxu0
      %v917 = vpop.f32.mrb[0].mxu0
      %v918 = vadd.f32 %v830, %v917
      %v919 = vpop.f32.mrb[0].mxu0
      %920 = vmatprep.mubr.bf16.mxu0 0
      %921 = vmatmul.mubr.bf16.gmra.mrb[0].mxu0 %v802
      %v922 = vpop.f32.mrb[0].mxu0
      %v923 = vadd.f32 %v830, %v922
      %v924 = vpop.f32.mrb[0].mxu0
      %v925 = vpop.f32.mrb[0].mxu0
      %v926 = vadd.f32 %v830, %v925
      %v927 = vpop.f32.mrb[0].mxu0
      %928 = vmatprep.mubr.bf16.mxu0 0
      %929 = vmatmul.mubr.bf16.gmra.mrb[0].mxu0 %v803
      %v930 = vpop.f32.mrb[0].mxu0
      %v931 = vadd.f32 %v830, %v930
      %v932 = vpop.f32.mrb[0].mxu0
      %v933 = vpop.f32.mrb[0].mxu0
      %v934 = vadd.f32 %v830, %v933
      %v935 = vpop.f32.mrb[0].mxu0
      %936 = vmatprep.mubr.bf16.mxu0 0
      %937 = vmatmul.mubr.bf16.gmra.mrb[0].mxu0 %v804
      %v938 = vpop.f32.mrb[0].mxu0
      %v939 = vadd.f32 %v830, %v938
      %v940 = vpop.f32.mrb[0].mxu0
      %v941 = vpop.f32.mrb[0].mxu0
      %v942 = vadd.f32 %v830, %v941
      %v943 = vpop.f32.mrb[0].mxu0
      %944 = vmatprep.mubr.bf16.mxu0 0
      %945 = vmatmul.mubr.bf16.gmra.mrb[0].mxu0 %v805
      %v946 = vpop.f32.mrb[0].mxu0
      %v947 = vadd.f32 %v830, %v946
      %v948 = vpop.f32.mrb[0].mxu0
      %v949 = vpop.f32.mrb[0].mxu0
      %v950 = vadd.f32 %v830, %v949
      %v951 = vpop.f32.mrb[0].mxu0
      %952 = vmatprep.mubr.bf16.mxu0 0
      %953 = vmatmul.mubr.bf16.gmra.mrb[0].mxu0 %v806
      %v954 = vpop.f32.mrb[0].mxu0
      %v955 = vadd.f32 %v830, %v954
      %v956 = vpop.f32.mrb[0].mxu0
      %v957 = vpop.f32.mrb[0].mxu0
      %v958 = vadd.f32 %v830, %v957
      %v959 = vpop.f32.mrb[0].mxu0
      %960 = vmatprep.mubr.bf16.mxu0 0
      %961 = vmatmul.mubr.bf16.gmra.mrb[0].mxu0 %v807
      %v962 = vpop.f32.mrb[0].mxu0
      %v963 = vadd.f32 %v830, %v962
      %v964 = vpop.f32.mrb[0].mxu0
      %v965 = vpop.f32.mrb[0].mxu0
      %v966 = vadd.f32 %v830, %v965
      %v967 = vpop.f32.mrb[0].mxu0
      %968 = vmatprep.mubr.bf16.mxu0 0
      %969 = vmatmul.mubr.bf16.gmra.mrb[0].mxu0 %v808
      %v970 = vpop.f32.mrb[0].mxu0
      %v971 = vadd.f32 %v830, %v970
      %v972 = vpop.f32.mrb[0].mxu0
      %v973 = vpop.f32.mrb[0].mxu0
      %v974 = vadd.f32 %v830, %v973
      %v975 = vpop.f32.mrb[0].mxu0
      %976 = vdwg.mxu0
      %977 = vmax.xlane.f32.xlu0 %v915
      %v978 = vpop.xlane.xlu0 %977
      %979 = vmax.xlane.f32.xlu0 %v918
      %v980 = vpop.xlane.xlu0 %979
      %981 = vmax.xlane.f32.xlu0 %v923
      %v982 = vpop.xlane.xlu0 %981
      %983 = vmax.xlane.f32.xlu0 %v926
      %v984 = vpop.xlane.xlu0 %983
      %985 = vmax.xlane.f32.xlu0 %v931
      %v986 = vpop.xlane.xlu0 %985
      %987 = vmax.xlane.f32.xlu0 %v934
      %v988 = vpop.xlane.xlu0 %987
      %989 = vmax.xlane.f32.xlu0 %v939
      %v990 = vpop.xlane.xlu0 %989
      %991 = vmax.xlane.f32.xlu0 %v942
      %v992 = vpop.xlane.xlu0 %991
      %993 = vmax.xlane.f32.xlu0 %v947
      %v994 = vpop.xlane.xlu0 %993
      %995 = vmax.xlane.f32.xlu0 %v950
      %v996 = vpop.xlane.xlu0 %995
      %997 = vmax.xlane.f32.xlu0 %v955
      %v998 = vpop.xlane.xlu0 %997
      %999 = vmax.xlane.f32.xlu0 %v958
      %v1000 = vpop.xlane.xlu0 %999
      %1001 = vmax.xlane.f32.xlu0 %v963
      %v1002 = vpop.xlane.xlu0 %1001
      %1003 = vmax.xlane.f32.xlu0 %v966
      %v1004 = vpop.xlane.xlu0 %1003
      %1005 = vmax.xlane.f32.xlu0 %v971
      %v1006 = vpop.xlane.xlu0 %1005
      %1007 = vmax.xlane.f32.xlu0 %v974
      %v1008 = vpop.xlane.xlu0 %1007
      %v1009 = vsub.f32 %v915, %v978
      %v1010 = vsub.f32 %v918, %v980
      %v1011 = vsub.f32 %v923, %v982
      %v1012 = vsub.f32 %v926, %v984
      %v1013 = vsub.f32 %v931, %v986
      %v1014 = vsub.f32 %v934, %v988
      %v1015 = vsub.f32 %v939, %v990
      %v1016 = vsub.f32 %v942, %v992
      %v1017 = vsub.f32 %v947, %v994
      %v1018 = vsub.f32 %v950, %v996
      %v1019 = vsub.f32 %v955, %v998
      %v1020 = vsub.f32 %v958, %v1000
      %v1021 = vsub.f32 %v963, %v1002
      %v1022 = vsub.f32 %v966, %v1004
      %v1023 = vsub.f32 %v971, %v1006
      %v1024 = vsub.f32 %v974, %v1008
      %v1025 = vmul.f32 %v1009, 1.442695
      %v1026 = vpow.pop %v1025
      %v1027 = vmul.f32 %v1010, 1.442695
      %v1028 = vpow.pop %v1027
      %v1029 = vmul.f32 %v1011, 1.442695
      %v1030 = vpow.pop %v1029
      %v1031 = vmul.f32 %v1012, 1.442695
      %v1032 = vpow.pop %v1031
      %v1033 = vmul.f32 %v1013, 1.442695
      %v1034 = vpow.pop %v1033
      %v1035 = vmul.f32 %v1014, 1.442695
      %v1036 = vpow.pop %v1035
      %v1037 = vmul.f32 %v1015, 1.442695
      %v1038 = vpow.pop %v1037
      %v1039 = vmul.f32 %v1016, 1.442695
      %v1040 = vpow.pop %v1039
      %v1041 = vmul.f32 %v1017, 1.442695
      %v1042 = vpow.pop %v1041
      %v1043 = vmul.f32 %v1018, 1.442695
      %v1044 = vpow.pop %v1043
      %v1045 = vmul.f32 %v1019, 1.442695
      %v1046 = vpow.pop %v1045
      %v1047 = vmul.f32 %v1020, 1.442695
      %v1048 = vpow.pop %v1047
      %v1049 = vmul.f32 %v1021, 1.442695
      %v1050 = vpow.pop %v1049
      %v1051 = vmul.f32 %v1022, 1.442695
      %v1052 = vpow.pop %v1051
      %v1053 = vmul.f32 %v1023, 1.442695
      %v1054 = vpow.pop %v1053
      %v1055 = vmul.f32 %v1024, 1.442695
      %v1056 = vpow.pop %v1055
      %1057 = vadd.xlane.f32.xlu0 %v1026
      %v1058 = vpop.xlane.xlu0 %1057
      %1059 = vadd.xlane.f32.xlu0 %v1028
      %v1060 = vpop.xlane.xlu0 %1059
      %1061 = vadd.xlane.f32.xlu0 %v1030
      %v1062 = vpop.xlane.xlu0 %1061
      %1063 = vadd.xlane.f32.xlu0 %v1032
      %v1064 = vpop.xlane.xlu0 %1063
      %1065 = vadd.xlane.f32.xlu0 %v1034
      %v1066 = vpop.xlane.xlu0 %1065
      %1067 = vadd.xlane.f32.xlu0 %v1036
      %v1068 = vpop.xlane.xlu0 %1067
      %1069 = vadd.xlane.f32.xlu0 %v1038
      %v1070 = vpop.xlane.xlu0 %1069
      %1071 = vadd.xlane.f32.xlu0 %v1040
      %v1072 = vpop.xlane.xlu0 %1071
      %1073 = vadd.xlane.f32.xlu0 %v1042
      %v1074 = vpop.xlane.xlu0 %1073
      %1075 = vadd.xlane.f32.xlu0 %v1044
      %v1076 = vpop.xlane.xlu0 %1075
      %1077 = vadd.xlane.f32.xlu0 %v1046
      %v1078 = vpop.xlane.xlu0 %1077
      %1079 = vadd.xlane.f32.xlu0 %v1048
      %v1080 = vpop.xlane.xlu0 %1079
      %1081 = vadd.xlane.f32.xlu0 %v1050
      %v1082 = vpop.xlane.xlu0 %1081
      %1083 = vadd.xlane.f32.xlu0 %v1052
      %v1084 = vpop.xlane.xlu0 %1083
      %1085 = vadd.xlane.f32.xlu0 %v1054
      %v1086 = vpop.xlane.xlu0 %1085
      %1087 = vadd.xlane.f32.xlu0 %v1056
      %v1088 = vpop.xlane.xlu0 %1087
      %v1089 = vlog2.pop %v1058
      %v1090 = vmul.f32 %v1089, 0.6931472
      %v1091 = vlog2.pop %v1060
      %v1092 = vmul.f32 %v1091, 0.6931472
      %v1093 = vlog2.pop %v1062
      %v1094 = vmul.f32 %v1093, 0.6931472
      %v1095 = vlog2.pop %v1064
      %v1096 = vmul.f32 %v1095, 0.6931472
      %v1097 = vlog2.pop %v1066
      %v1098 = vmul.f32 %v1097, 0.6931472
      %v1099 = vlog2.pop %v1068
      %v1100 = vmul.f32 %v1099, 0.6931472
      %v1101 = vlog2.pop %v1070
      %v1102 = vmul.f32 %v1101, 0.6931472
      %v1103 = vlog2.pop %v1072
      %v1104 = vmul.f32 %v1103, 0.6931472
      %v1105 = vlog2.pop %v1074
      %v1106 = vmul.f32 %v1105, 0.6931472
      %v1107 = vlog2.pop %v1076
      %v1108 = vmul.f32 %v1107, 0.6931472
      %v1109 = vlog2.pop %v1078
      %v1110 = vmul.f32 %v1109, 0.6931472
      %v1111 = vlog2.pop %v1080
      %v1112 = vmul.f32 %v1111, 0.6931472
      %v1113 = vlog2.pop %v1082
      %v1114 = vmul.f32 %v1113, 0.6931472
      %v1115 = vlog2.pop %v1084
      %v1116 = vmul.f32 %v1115, 0.6931472
      %v1117 = vlog2.pop %v1086
      %v1118 = vmul.f32 %v1117, 0.6931472
      %v1119 = vlog2.pop %v1088
      %v1120 = vmul.f32 %v1119, 0.6931472
      %v1121 = vsub.f32 %v1009, %v1090
      %v1122 = vsub.f32 %v1010, %v1092
      %v1123 = vsub.f32 %v1011, %v1094
      %v1124 = vsub.f32 %v1012, %v1096
      %v1125 = vsub.f32 %v1013, %v1098
      %v1126 = vsub.f32 %v1014, %v1100
      %v1127 = vsub.f32 %v1015, %v1102
      %v1128 = vsub.f32 %v1016, %v1104
      %v1129 = vsub.f32 %v1017, %v1106
      %v1130 = vsub.f32 %v1018, %v1108
      %v1131 = vsub.f32 %v1019, %v1110
      %v1132 = vsub.f32 %v1020, %v1112
      %v1133 = vsub.f32 %v1021, %v1114
      %v1134 = vsub.f32 %v1022, %v1116
      %v1135 = vsub.f32 %v1023, %v1118
      %v1136 = vsub.f32 %v1024, %v1120
      %1137 = vst [vmem:[%s229] sm:$0xff] %v1121
      %1138 = vst [vmem:[%s229 + $0x8] sm:$0xff] %v1122
      %1139 = vst [vmem:[%s229 + $0x10] sm:$0xff] %v1123
      %1140 = vst [vmem:[%s229 + $0x18] sm:$0xff] %v1124
      %1141 = vst [vmem:[%s229 + $0x20] sm:$0xff] %v1125
      %1142 = vst [vmem:[%s229 + $0x28] sm:$0xff] %v1126
      %1143 = vst [vmem:[%s229 + $0x30] sm:$0xff] %v1127
      %1144 = vst [vmem:[%s229 + $0x38] sm:$0xff] %v1128
      %1145 = vst [vmem:[%s229 + $0x40] sm:$0xff] %v1129
      %1146 = vst [vmem:[%s229 + $0x48] sm:$0xff] %v1130
      %1147 = vst [vmem:[%s229 + $0x50] sm:$0xff] %v1131
      %1148 = vst [vmem:[%s229 + $0x58] sm:$0xff] %v1132
      %1149 = vst [vmem:[%s229 + $0x60] sm:$0xff] %v1133
      %1150 = vst [vmem:[%s229 + $0x68] sm:$0xff] %v1134
      %1151 = vst [vmem:[%s229 + $0x70] sm:$0xff] %v1135
      %1152 = vst [vmem:[%s229 + $0x78] sm:$0xff] %v1136
      %s1153 = smul.u32 16, %s16
      %p1154 = scmp.lt.s32.totalorder %s1153, 31
      %s1155 = scalar_select %p1154, %s1153, 31
      %s1156 = smul.addr %s1155, 8
      %s1157 = scalar_lea.vmem %s5, %s1156
      // Predicated region
      $region41: #{_lambda_.1} parent=39 // pred_check
        %p1158 = pneg %p144
      $region42: #{_lambda_.1} parent=39 // pred_check_branch
        %1160 = sbr.rel (%p1158) target = $region44
      $region43: #{_lambda_.1} parent=39 // pred_region
        %s1161 = smul.u32 16, %s16
      $region44: #{_lambda_.1} parent=39 // pred_fallthru
        _
    $region40: #{_lambda_.1} parent=5 // pred_fallthru
      _
    %p1162 = scmp.le.s32.totalorder 2, %s11
    // Predicated region
    $region45: #{_lambda_.1} parent=5 // pred_check
      %p1163 = pneg %p1162
    $region46: #{_lambda_.1} parent=5 // pred_check_branch
      %1165 = sbr.rel (%p1163) target = $region48
    $region47: #{_lambda_.1} parent=5 // pred_region
      %s1166 = ssub.s32 %s11, 2
      // Predicated region
      $region49: #{_lambda_.1} parent=47 // pred_check
        %p1167 = pneg %p150
      $region50: #{_lambda_.1} parent=47 // pred_check_branch
        %1169 = sbr.rel (%p1167) target = $region52
      $region51: #{_lambda_.1} parent=47 // pred_region
        %s1170 = smul.u32 16, %s17
        %p1171 = scmp.lt.s32.totalorder %s1170, 31
        %s1172 = scalar_select %p1171, %s1170, 31
        %s1173 = smul.addr %s1172, 8
        %s1174 = scalar_lea.vmem %s5, %s1173
      $region52: #{_lambda_.1} parent=47 // pred_fallthru
        _
    $region48: #{_lambda_.1} parent=5 // pred_fallthru
      _
  $region6: #{_lambda_.1} parent=0 // loop_footer
    %s15 = sadd.s32 1, %s11
  $region7: #{_lambda_.1} parent=0 // loop_footer_branch
    %10 = sbr.rel target = $region3
  $region8: #{_lambda_.1} parent=0 // loop_exit
    _

</llo_original>
